<compile_context>
chip_gen: v7x
topology: tpu7x:2x2x1
jax: 0.10.0
libtpu: 0.0.40
codegen_flags: <defaults>
</compile_context>

<pallas_src>
import jax
import jax.numpy as jnp
from jax.experimental import pallas as pl
from jax.experimental.pallas import tpu as pltpu


def _round_up(x: int, m: int) -> int:
    return ((x + m - 1) // m) * m


def actor_kernel(state_ref, inv_std_ref, shift_ref,
                 w1_ref, b1_ref, w2_ref, b2_ref, w3_ref, b3_ref,
                 out_ref):
    # Folded normalization: (state - avg) / std  ==  state * inv_std + (-avg * inv_std)
    x = state_ref[...] * inv_std_ref[...] + shift_ref[...]

    # Matmul operand dtype follows the stored weight dtype (f32 default, bf16 optional);
    # accumulation / bias / activations / tanh stay f32 (v5e VPU/EUP have no bf16).
    mm_dtype = w1_ref.dtype

    h = jnp.dot(x.astype(mm_dtype), w1_ref[...],
                preferred_element_type=jnp.float32) + b1_ref[...]
    h = jnp.maximum(h, 0.0)

    h = jnp.dot(h.astype(mm_dtype), w2_ref[...],
                preferred_element_type=jnp.float32) + b2_ref[...]
    h = jnp.maximum(h, 0.0)

    a = jnp.dot(h.astype(mm_dtype), w3_ref[...],
                preferred_element_type=jnp.float32) + b3_ref[...]
    out_ref[...] = jnp.tanh(a)


def prepare_actor_params(state_avg, state_std, params, lane=128, dtype=jnp.float32):
    """One-time param prep.
    * Hidden/action dims are zero-padded to multiples of 128 (lane-dense MXU tiles and
      unmasked stores); padded rows/cols/biases contribute exactly 0 and padded output
      columns give tanh(0)=0 which the wrapper slices off.
    * The state (contraction) dim of w1 is NOT padded, so the kernel can read the raw,
      unpadded state straight from HBM.
    * Normalization is folded: inv_std = 1/std, shift = -avg/std.
    * `dtype=jnp.bfloat16` stores weights (matmul operands) in bf16: halves weight DMA/VMEM
      everywhere and ~3x MXU throughput on v5e. Biases/norm stay f32."""
    (w1, b1), (w2, b2), (w3, b3) = params
    S, H1 = w1.shape
    H2 = w2.shape[1]
    A = w3.shape[1]
    H1p, H2p, Ap = (_round_up(d, lane) for d in (H1, H2, A))

    def pad2(x, rows, cols, cast=None):
        x = jnp.asarray(x, jnp.float32)
        if x.ndim == 1:
            x = x.reshape(1, -1)
        x = jnp.pad(x, ((0, rows - x.shape[0]), (0, cols - x.shape[1])))
        return x.astype(cast) if cast is not None else x

    inv_std = (1.0 / jnp.asarray(state_std, jnp.float32)).reshape(1, S)
    avg = jnp.asarray(state_avg, jnp.float32).reshape(1, S)
    shift = -avg * inv_std

    return {
        "inv_std": inv_std,
        "shift": shift,
        "w1": pad2(w1, S, H1p, dtype), "b1": pad2(b1, 1, H1p),
        "w2": pad2(w2, H1p, H2p, dtype), "b2": pad2(b2, 1, H2p),
        "w3": pad2(w3, H2p, Ap, dtype), "b3": pad2(b3, 1, Ap),
    }


def actor_forward(state, prepped, action_dim, *, block_b=1024):
    """state: [B, state_dim] float32 (unpadded). prepped: output of prepare_actor_params.
    Returns [B, action_dim] float32."""
    B, S = state.shape
    inv_std, shift = prepped["inv_std"], prepped["shift"]
    w1, b1 = prepped["w1"], prepped["b1"]
    w2, b2 = prepped["w2"], prepped["b2"]
    w3, b3 = prepped["w3"], prepped["b3"]
    H1p = w1.shape[1]
    H2p = w2.shape[1]
    Ap = w3.shape[1]

    if state.dtype != jnp.float32:
        state = state.astype(jnp.float32)

    # Batch tile: sublane-aligned (multiple of 8), capped at block_b. When the whole batch
    # fits in one block, split it into >=2 grid steps anyway so the "parallel" grid axis can
    # feed both TensorCores on v7x (no-op on single-TC v5e/v6e, and we never go below 8 rows).
    B8 = _round_up(max(B, 8), 8)
    if B8 <= block_b:
        tb = max(8, _round_up(pl.cdiv(B8, 2), 8))
    else:
        tb = _round_up(min(block_b, B8), 8)
    grid = (pl.cdiv(B, tb),)  # ragged last tile: OOB output rows are masked, inputs undefined
                              # only for rows that are never returned.

    batch_map = lambda i: (i, 0)   # activation tiles march over batch
    const_map = lambda i: (0, 0)   # weights/biases/norm stay VMEM-resident across steps

    itemsize = lambda a: int(a.size) * int(a.dtype.itemsize)
    flops = 2 * B * (S * H1p + H1p * H2p + H2p * Ap)
    bytes_accessed = (itemsize(state) + itemsize(inv_std) + itemsize(shift)
                      + itemsize(w1) + itemsize(b1) + itemsize(w2) + itemsize(b2)
                      + itemsize(w3) + itemsize(b3) + B * Ap * 4)
    cost = pl.CostEstimate(flops=flops, transcendentals=B * Ap,
                           bytes_accessed=bytes_accessed)

    # TODO(synk): for very large hidden dims on v7x, single-buffer the constant weight specs
    # (pipeline_mode=pl.Buffered(1)) to halve their resident-VMEM cost; at these sizes the
    # default double-buffering costs only a few hundred KiB so it is left at the default.
    out = pl.pallas_call(
        actor_kernel,
        out_shape=jax.ShapeDtypeStruct((B, Ap), jnp.float32),
        grid=grid,
        in_specs=[
            pl.BlockSpec((tb, S), batch_map),     # raw, unpadded state tile (pipelined)
            pl.BlockSpec((1, S), const_map),      # 1 / state_std
            pl.BlockSpec((1, S), const_map),      # -state_avg / state_std
            pl.BlockSpec((S, H1p), const_map),    # w1  (contraction dim unpadded)
            pl.BlockSpec((1, H1p), const_map),    # b1
            pl.BlockSpec((H1p, H2p), const_map),  # w2
            pl.BlockSpec((1, H2p), const_map),    # b2
            pl.BlockSpec((H2p, Ap), const_map),   # w3
            pl.BlockSpec((1, Ap), const_map),     # b3
        ],
        out_specs=pl.BlockSpec((tb, Ap), batch_map),   # lane-dense (128-wide) stores
        compiler_params=pltpu.CompilerParams(
            dimension_semantics=("parallel",),   # shard batch tiles across TCs (v7x megacore)
            vmem_limit_bytes=32 * 1024 * 1024,
        ),
        cost_estimate=cost,
    )(state, inv_std, shift, w1, b1, w2, b2, w3, b3)

    return out[:, :action_dim]


def make_params(key, state_dim, net_dims, action_dim):
    """Deterministic parameter init matching the module's shapes.
    Hidden layers: small uniform init; last layer: orthogonal(std=0.5), bias=1e-6."""
    dims = [state_dim, *net_dims, action_dim]
    keys = jax.random.split(key, len(dims) - 1)
    params = []
    for i in range(len(dims) - 1):
        d_in, d_out = dims[i], dims[i + 1]
        if i == len(dims) - 2:
            # layer_init_with_orthogonal(layer, std=0.5, bias_const=1e-6)
            w = jax.nn.initializers.orthogonal(scale=0.5)(keys[i], (d_in, d_out), jnp.float32)
            b = jnp.full((1, d_out), 1e-6, dtype=jnp.float32)
        else:
            bound = 1.0 / jnp.sqrt(d_in)
            w = jax.random.uniform(keys[i], (d_in, d_out), jnp.float32, -bound, bound)
            b = jnp.zeros((1, d_out), dtype=jnp.float32)
        params.append((w, b))
    return tuple(params)


def actor_forward_ref(state, state_avg, state_std, params):
    x = (state - state_avg) / state_std
    (w1, b1), (w2, b2), (w3, b3) = params
    h = jnp.maximum(x @ w1 + b1, 0.0)
    h = jnp.maximum(h @ w2 + b2, 0.0)
    return jnp.tanh(h @ w3 + b3)


# TODO(synk): Actor.get_action (Normal sampling + clip) is host-side stochastic policy logic,
#             not part of forward(); only forward() is implemented as a kernel.

if __name__ == "__main__":
    # Small shapes: state_dim=16, net_dims=[32, 32], action_dim=4
    state_dim, action_dim = 16, 4
    net_dims = [32, 32]

    key = jax.random.PRNGKey(0)
    k_state, k_params, k_avg, k_std, k_state2 = jax.random.split(key, 5)

    # Non-trivial normalization buffers to exercise the folded state-norm path.
    state_avg = 0.1 * jax.random.normal(k_avg, (state_dim,), dtype=jnp.float32)
    state_std = 0.5 + jax.random.uniform(k_std, (state_dim,), dtype=jnp.float32)

    params = make_params(k_params, state_dim, net_dims, action_dim)
    prepped = prepare_actor_params(state_avg, state_std, params)

    # 1) f32 path, small batch (single grid step).
    B = 8
    state = jax.random.normal(k_state, (B, state_dim), dtype=jnp.float32)
    out = jax.block_until_ready(actor_forward(state, prepped, action_dim))
    ref = actor_forward_ref(state, state_avg, state_std, params)
    assert out.shape == (B, action_dim)
    assert jnp.allclose(out, ref, atol=1e-5, rtol=1e-5)

    # 2) Ragged batch (B not a multiple of the tile) -> masked boundary writes, 2 grid steps.
    B2 = 300
    state2 = jax.random.normal(k_state2, (B2, state_dim), dtype=jnp.float32)
    out2 = jax.block_until_ready(actor_forward(state2, prepped, action_dim, block_b=256))
    ref2 = actor_forward_ref(state2, state_avg, state_std, params)
    assert out2.shape == (B2, action_dim)
    assert jnp.allclose(out2, ref2, atol=1e-5, rtol=1e-5)

    # 3) bf16 weight / matmul-operand path (bandwidth opt); f32 accumulation, loose tolerance.
    prepped_bf16 = prepare_actor_params(state_avg, state_std, params, dtype=jnp.bfloat16)
    out3 = jax.block_until_ready(actor_forward(state, prepped_bf16, action_dim))
    assert out3.shape == (B, action_dim)
    assert jnp.allclose(out3, ref, atol=5e-2)

    print("KERNEL_OK")
</pallas_src>

<mosaic_0001>
module attributes {stable_mosaic.version = 11 : i64} {
  func.func @actor_kernel(%arg0: i32, %arg1: memref<8x16xf32, #tpu.memory_space<vmem>>, %arg2: memref<1x16xf32, #tpu.memory_space<vmem>>, %arg3: memref<1x16xf32, #tpu.memory_space<vmem>>, %arg4: memref<16x128xf32, #tpu.memory_space<vmem>>, %arg5: memref<1x128xf32, #tpu.memory_space<vmem>>, %arg6: memref<128x128xf32, #tpu.memory_space<vmem>>, %arg7: memref<1x128xf32, #tpu.memory_space<vmem>>, %arg8: memref<128x128xf32, #tpu.memory_space<vmem>>, %arg9: memref<1x128xf32, #tpu.memory_space<vmem>>, %arg10: memref<8x128xf32, #tpu.memory_space<vmem>>) attributes {dimension_semantics = [#tpu.dimension_semantics<parallel>], iteration_bounds = array<i64: 1>, scalar_prefetch = 0 : i64, scratch_operands = 0 : i64, tpu.core_type = #tpu.core_type<tc>, window_params = [{transform_indices = @transform_0, window_bounds = array<i64: 8, 16>}, {pipeline_mode = #tpu.pipeline_mode<synchronous>, transform_indices = @transform_1, window_bounds = array<i64: 1, 16>}, {pipeline_mode = #tpu.pipeline_mode<synchronous>, transform_indices = @transform_2, window_bounds = array<i64: 1, 16>}, {pipeline_mode = #tpu.pipeline_mode<synchronous>, transform_indices = @transform_3, window_bounds = array<i64: 16, 128>}, {pipeline_mode = #tpu.pipeline_mode<synchronous>, transform_indices = @transform_4, window_bounds = array<i64: 1, 128>}, {pipeline_mode = #tpu.pipeline_mode<synchronous>, transform_indices = @transform_5, window_bounds = array<i64: 128, 128>}, {pipeline_mode = #tpu.pipeline_mode<synchronous>, transform_indices = @transform_6, window_bounds = array<i64: 1, 128>}, {pipeline_mode = #tpu.pipeline_mode<synchronous>, transform_indices = @transform_7, window_bounds = array<i64: 128, 128>}, {pipeline_mode = #tpu.pipeline_mode<synchronous>, transform_indices = @transform_8, window_bounds = array<i64: 1, 128>}, {transform_indices = @transform_9, window_bounds = array<i64: 8, 128>}]} {
    %c0 = arith.constant 0 : index
    %c0_0 = arith.constant 0 : index
    %0 = vector.load %arg1[%c0, %c0_0] : memref<8x16xf32, #tpu.memory_space<vmem>>, vector<8x16xf32>
    %c0_1 = arith.constant 0 : index
    %c0_2 = arith.constant 0 : index
    %1 = vector.load %arg2[%c0_1, %c0_2] : memref<1x16xf32, #tpu.memory_space<vmem>>, vector<1x16xf32>
    %2 = vector.broadcast %1 : vector<1x16xf32> to vector<8x16xf32>
    %3 = arith.mulf %0, %2 : vector<8x16xf32>
    %c0_3 = arith.constant 0 : index
    %c0_4 = arith.constant 0 : index
    %4 = vector.load %arg3[%c0_3, %c0_4] : memref<1x16xf32, #tpu.memory_space<vmem>>, vector<1x16xf32>
    %5 = vector.broadcast %4 : vector<1x16xf32> to vector<8x16xf32>
    %6 = arith.addf %3, %5 : vector<8x16xf32>
    %c0_5 = arith.constant 0 : index
    %c0_6 = arith.constant 0 : index
    %7 = vector.load %arg4[%c0_5, %c0_6] : memref<16x128xf32, #tpu.memory_space<vmem>>, vector<16x128xf32>
    %cst = arith.constant dense<0.000000e+00> : vector<8x128xf32>
    %8 = tpu.matmul %6, %7, %cst {dimension_numbers = #tpu.dot_dimension_numbers<[1], [0], [0], [1], [0, 0, 1, 1], [], []>} : vector<8x16xf32>, vector<16x128xf32>, vector<8x128xf32> -> vector<8x128xf32>
    %c0_7 = arith.constant 0 : index
    %c0_8 = arith.constant 0 : index
    %9 = vector.load %arg5[%c0_7, %c0_8] : memref<1x128xf32, #tpu.memory_space<vmem>>, vector<1x128xf32>
    %10 = vector.broadcast %9 : vector<1x128xf32> to vector<8x128xf32>
    %11 = arith.addf %8, %10 : vector<8x128xf32>
    %cst_9 = arith.constant 0.000000e+00 : f32
    %12 = vector.broadcast %cst_9 : f32 to vector<8x128xf32>
    %13 = arith.maximumf %11, %12 : vector<8x128xf32>
    %c0_10 = arith.constant 0 : index
    %c0_11 = arith.constant 0 : index
    %14 = vector.load %arg6[%c0_10, %c0_11] : memref<128x128xf32, #tpu.memory_space<vmem>>, vector<128x128xf32>
    %cst_12 = arith.constant dense<0.000000e+00> : vector<8x128xf32>
    %15 = tpu.matmul %13, %14, %cst_12 {dimension_numbers = #tpu.dot_dimension_numbers<[1], [0], [0], [1], [0, 0, 1, 1], [], []>} : vector<8x128xf32>, vector<128x128xf32>, vector<8x128xf32> -> vector<8x128xf32>
    %c0_13 = arith.constant 0 : index
    %c0_14 = arith.constant 0 : index
    %16 = vector.load %arg7[%c0_13, %c0_14] : memref<1x128xf32, #tpu.memory_space<vmem>>, vector<1x128xf32>
    %17 = vector.broadcast %16 : vector<1x128xf32> to vector<8x128xf32>
    %18 = arith.addf %15, %17 : vector<8x128xf32>
    %cst_15 = arith.constant 0.000000e+00 : f32
    %19 = vector.broadcast %cst_15 : f32 to vector<8x128xf32>
    %20 = arith.maximumf %18, %19 : vector<8x128xf32>
    %c0_16 = arith.constant 0 : index
    %c0_17 = arith.constant 0 : index
    %21 = vector.load %arg8[%c0_16, %c0_17] : memref<128x128xf32, #tpu.memory_space<vmem>>, vector<128x128xf32>
    %cst_18 = arith.constant dense<0.000000e+00> : vector<8x128xf32>
    %22 = tpu.matmul %20, %21, %cst_18 {dimension_numbers = #tpu.dot_dimension_numbers<[1], [0], [0], [1], [0, 0, 1, 1], [], []>} : vector<8x128xf32>, vector<128x128xf32>, vector<8x128xf32> -> vector<8x128xf32>
    %c0_19 = arith.constant 0 : index
    %c0_20 = arith.constant 0 : index
    %23 = vector.load %arg9[%c0_19, %c0_20] : memref<1x128xf32, #tpu.memory_space<vmem>>, vector<1x128xf32>
    %24 = vector.broadcast %23 : vector<1x128xf32> to vector<8x128xf32>
    %25 = arith.addf %22, %24 : vector<8x128xf32>
    %26 = math.tanh %25 : vector<8x128xf32>
    %c0_21 = arith.constant 0 : index
    %c0_22 = arith.constant 0 : index
    %27 = vector.load %arg10[%c0_21, %c0_22] : memref<8x128xf32, #tpu.memory_space<vmem>>, vector<8x128xf32>
    tpu.vector_store %arg10[%c0_21, %c0_22], %26 {strides = array<i32>} : memref<8x128xf32, #tpu.memory_space<vmem>>, vector<8x128xf32>,
    return
  }
  func.func @transform_0(%arg0: i32) -> (i32, i32) {
    %c0_i32 = arith.constant 0 : i32
    %c0_i32_0 = arith.constant 0 : i32
    return %arg0, %c0_i32 : i32, i32
  }
  func.func @transform_1(%arg0: i32) -> (i32, i32) {
    %c0_i32 = arith.constant 0 : i32
    %c0_i32_0 = arith.constant 0 : i32
    %c0_i32_1 = arith.constant 0 : i32
    return %c0_i32, %c0_i32_0 : i32, i32
  }
  func.func @transform_2(%arg0: i32) -> (i32, i32) {
    %c0_i32 = arith.constant 0 : i32
    %c0_i32_0 = arith.constant 0 : i32
    %c0_i32_1 = arith.constant 0 : i32
    return %c0_i32, %c0_i32_0 : i32, i32
  }
  func.func @transform_3(%arg0: i32) -> (i32, i32) {
    %c0_i32 = arith.constant 0 : i32
    %c0_i32_0 = arith.constant 0 : i32
    %c0_i32_1 = arith.constant 0 : i32
    return %c0_i32, %c0_i32_0 : i32, i32
  }
  func.func @transform_4(%arg0: i32) -> (i32, i32) {
    %c0_i32 = arith.constant 0 : i32
    %c0_i32_0 = arith.constant 0 : i32
    %c0_i32_1 = arith.constant 0 : i32
    return %c0_i32, %c0_i32_0 : i32, i32
  }
  func.func @transform_5(%arg0: i32) -> (i32, i32) {
    %c0_i32 = arith.constant 0 : i32
    %c0_i32_0 = arith.constant 0 : i32
    %c0_i32_1 = arith.constant 0 : i32
    return %c0_i32, %c0_i32_0 : i32, i32
  }
  func.func @transform_6(%arg0: i32) -> (i32, i32) {
    %c0_i32 = arith.constant 0 : i32
    %c0_i32_0 = arith.constant 0 : i32
    %c0_i32_1 = arith.constant 0 : i32
    return %c0_i32, %c0_i32_0 : i32, i32
  }
  func.func @transform_7(%arg0: i32) -> (i32, i32) {
    %c0_i32 = arith.constant 0 : i32
    %c0_i32_0 = arith.constant 0 : i32
    %c0_i32_1 = arith.constant 0 : i32
    return %c0_i32, %c0_i32_0 : i32, i32
  }
  func.func @transform_8(%arg0: i32) -> (i32, i32) {
    %c0_i32 = arith.constant 0 : i32
    %c0_i32_0 = arith.constant 0 : i32
    %c0_i32_1 = arith.constant 0 : i32
    return %c0_i32, %c0_i32_0 : i32, i32
  }
  func.func @transform_9(%arg0: i32) -> (i32, i32) {
    %c0_i32 = arith.constant 0 : i32
    %c0_i32_0 = arith.constant 0 : i32
    return %arg0, %c0_i32 : i32, i32
  }
}

</mosaic_0001>

<llo_original>
// kernel: tpu_custom_call.1
$region0: #{tpu_custom_call.1}
  #allocation0 [shape = 'u32[]', space=smem, size = 0x4, offset = 0x4, fixed_abs, tag = 'smem constant byte address 0x4 - core index']
  #allocation1 [shape = 'u32[144,128]{1,0:T(1,128)}', space=vmem, size = 0x12000, scoped, tag = 'internal scratch']
  %s0 = inlined_call_operand.hbm [shape: f32[8,16], index: 0, kind: input, shape index: {}]
  %s1 = inlined_call_operand.vmem [shape: f32[1,16], index: 1, kind: input, shape index: {}]
  %s2 = inlined_call_operand.vmem [shape: f32[1,16], index: 2, kind: input, shape index: {}]
  %s3 = inlined_call_operand.hbm [shape: f32[16,128], index: 3, kind: input, shape index: {}]
  %s4 = inlined_call_operand.vmem [shape: f32[1,128], index: 4, kind: input, shape index: {}]
  %s5 = inlined_call_operand.hbm [shape: f32[128,128], index: 5, kind: input, shape index: {}]
  %s6 = inlined_call_operand.vmem [shape: f32[1,128], index: 6, kind: input, shape index: {}]
  %s7 = inlined_call_operand.hbm [shape: f32[128,128], index: 7, kind: input, shape index: {}]
  %s8 = inlined_call_operand.vmem [shape: f32[1,128], index: 8, kind: input, shape index: {}]
  %s9 = inlined_call_operand.hbm [shape: f32[8,128], index: 9, kind: output, shape index: {}]
  %s10 = sld [smem:[#allocation0]]
  $region62: #{tpu_custom_call.1} parent=0
    _
  %s12 = ssub.s32 1, %s10
  %s13 = scalar_select 0, %s12, %s10
  $region1: #{tpu_custom_call.1} parent=0
    #allocation2 [shape = 'u8[4096]{0}', space=vmem, size = 0x1000, scoped, tag = 'input window, operand 0, single buffered']
    #allocation3 [shape = 's32[1]{0}', space=sflag, size = 0x4, scoped, tag = 'scoped memory for tpu_custom_call.1']
    #allocation4 [shape = 's32[1]{0}', space=sflag, size = 0x4, scoped, tag = 'scoped memory for tpu_custom_call.1']
    #allocation5 [shape = 'u8[8192]{0}', space=vmem, size = 0x2000, scoped, tag = 'input window, operand 3, single buffered']
    #allocation6 [shape = 's32[1]{0}', space=sflag, size = 0x4, scoped, tag = 'scoped memory for tpu_custom_call.1']
    #allocation7 [shape = 'u8[65536]{0}', space=vmem, size = 0x10000, scoped, tag = 'input window, operand 5, single buffered']
    #allocation8 [shape = 'u8[65536]{0}', space=vmem, size = 0x10000, scoped, tag = 'input window, operand 7, single buffered']
    #allocation9 [shape = 's32[1]{0}', space=sflag, size = 0x4, scoped, tag = 'scoped memory for tpu_custom_call.1']
    #allocation10 [shape = 'u8[4096]{0}', space=vmem, size = 0x1000, scoped, tag = 'output window, operand 0, single buffered']
    %14 = vsyncpa [#allocation3], 0
    %15 = vsyncpa [#allocation6], 0
    %16 = vsyncpa [#allocation9], 0
    %17 = vsyncpa [#allocation4], 0
    // Predicated region
    $region2: #{tpu_custom_call.1} parent=1 // pred_check
      _
    $region3: #{tpu_custom_call.1} parent=1 // pred_check_branch
      %19 = sbr.rel (0) target = $region5
    $region4: #{tpu_custom_call.1} parent=1 // pred_region
      %s21 = ssub.s32 128, 128
      %22 = vsyncadd [#allocation3], %s21
      %s24 = sshll.u32 [#allocation2], 4
      %s25 = int_to_ptr.vmem [resolvable:$true] %s24
      %27 = dma.hbm_to_vmem [thread:$0]  %s0, 128, %s25, [#allocation3]
    $region5: #{tpu_custom_call.1} parent=1 // pred_fallthru
      _
    // Predicated region
    $region6: #{tpu_custom_call.1} parent=1 // pred_check
      _
    $region7: #{tpu_custom_call.1} parent=1 // pred_check_branch
      %29 = sbr.rel (0) target = $region9
    $region8: #{tpu_custom_call.1} parent=1 // pred_region
      _
    $region9: #{tpu_custom_call.1} parent=1 // pred_fallthru
      _
    // Predicated region
    $region10: #{tpu_custom_call.1} parent=1 // pred_check
      _
    $region11: #{tpu_custom_call.1} parent=1 // pred_check_branch
      %31 = sbr.rel (0) target = $region13
    $region12: #{tpu_custom_call.1} parent=1 // pred_region
      _
    $region13: #{tpu_custom_call.1} parent=1 // pred_fallthru
      _
    // Predicated region
    $region14: #{tpu_custom_call.1} parent=1 // pred_check
      _
    $region15: #{tpu_custom_call.1} parent=1 // pred_check_branch
      %33 = sbr.rel (0) target = $region17
    $region16: #{tpu_custom_call.1} parent=1 // pred_region
      %s35 = ssub.s32 256, 256
      %36 = vsyncadd [#allocation6], %s35
      %s37 = sshll.u32 [#allocation5], 4
      %s38 = int_to_ptr.vmem [resolvable:$true] %s37
      %43 = dma.hbm_to_vmem [thread:$0]  %s3, 256, %s38, [#allocation6], 128, 128, 8
    $region17: #{tpu_custom_call.1} parent=1 // pred_fallthru
      _
    // Predicated region
    $region18: #{tpu_custom_call.1} parent=1 // pred_check
      _
    $region19: #{tpu_custom_call.1} parent=1 // pred_check_branch
      %45 = sbr.rel (0) target = $region21
    $region20: #{tpu_custom_call.1} parent=1 // pred_region
      _
    $region21: #{tpu_custom_call.1} parent=1 // pred_fallthru
      _
    // Predicated region
    $region22: #{tpu_custom_call.1} parent=1 // pred_check
      _
    $region23: #{tpu_custom_call.1} parent=1 // pred_check_branch
      %47 = sbr.rel (0) target = $region25
    $region24: #{tpu_custom_call.1} parent=1 // pred_region
      %s49 = ssub.s32 2048, 2048
      %50 = vsyncadd [#allocation6], %s49
      %s51 = sshll.u32 [#allocation7], 4
      %s52 = int_to_ptr.vmem [resolvable:$true] %s51
      %57 = dma.hbm_to_vmem [thread:$0]  %s5, 2048, %s52, [#allocation6], 128, 128, 8
    $region25: #{tpu_custom_call.1} parent=1 // pred_fallthru
      _
    // Predicated region
    $region26: #{tpu_custom_call.1} parent=1 // pred_check
      _
    $region27: #{tpu_custom_call.1} parent=1 // pred_check_branch
      %59 = sbr.rel (0) target = $region29
    $region28: #{tpu_custom_call.1} parent=1 // pred_region
      _
    $region29: #{tpu_custom_call.1} parent=1 // pred_fallthru
      _
    // Predicated region
    $region30: #{tpu_custom_call.1} parent=1 // pred_check
      _
    $region31: #{tpu_custom_call.1} parent=1 // pred_check_branch
      %61 = sbr.rel (0) target = $region33
    $region32: #{tpu_custom_call.1} parent=1 // pred_region
      %s63 = ssub.s32 2048, 2048
      %64 = vsyncadd [#allocation9], %s63
      %s65 = sshll.u32 [#allocation8], 4
      %s66 = int_to_ptr.vmem [resolvable:$true] %s65
      %71 = dma.hbm_to_vmem [thread:$0]  %s7, 2048, %s66, [#allocation9], 128, 128, 8
    $region33: #{tpu_custom_call.1} parent=1 // pred_fallthru
      _
    // Predicated region
    $region34: #{tpu_custom_call.1} parent=1 // pred_check
      _
    $region35: #{tpu_custom_call.1} parent=1 // pred_check_branch
      %73 = sbr.rel (0) target = $region37
    $region36: #{tpu_custom_call.1} parent=1 // pred_region
      _
    $region37: #{tpu_custom_call.1} parent=1 // pred_fallthru
      _
    // Predicated region
    $region38: #{tpu_custom_call.1} parent=1 // pred_check
      _
    $region39: #{tpu_custom_call.1} parent=1 // pred_check_branch
      %75 = sbr.rel (0) target = $region41
    $region40: #{tpu_custom_call.1} parent=1 // pred_region
      %76 = dma.done [#allocation3], 128
    $region41: #{tpu_custom_call.1} parent=1 // pred_fallthru
      _
    // Predicated region
    $region42: #{tpu_custom_call.1} parent=1 // pred_check
      _
    $region43: #{tpu_custom_call.1} parent=1 // pred_check_branch
      %78 = sbr.rel (0) target = $region45
    $region44: #{tpu_custom_call.1} parent=1 // pred_region
      %79 = dma.done [#allocation6], 256
    $region45: #{tpu_custom_call.1} parent=1 // pred_fallthru
      _
    // Predicated region
    $region46: #{tpu_custom_call.1} parent=1 // pred_check
      _
    $region47: #{tpu_custom_call.1} parent=1 // pred_check_branch
      %81 = sbr.rel (0) target = $region49
    $region48: #{tpu_custom_call.1} parent=1 // pred_region
      %82 = dma.done [#allocation6], 2048
    $region49: #{tpu_custom_call.1} parent=1 // pred_fallthru
      _
    // Predicated region
    $region50: #{tpu_custom_call.1} parent=1 // pred_check
      _
    $region51: #{tpu_custom_call.1} parent=1 // pred_check_branch
      %84 = sbr.rel (0) target = $region53
    $region52: #{tpu_custom_call.1} parent=1 // pred_region
      %85 = dma.done [#allocation9], 2048
    $region53: #{tpu_custom_call.1} parent=1 // pred_fallthru
      _
    %v86 = vld [vmem:[#allocation2] sm:$0xff]
    %v87 = vld [vmem:[%s1] sm:$0x1]
    %v89 = vlaneseq
    %v90 = vshrl.u32 %v89, 7
    %v91 = vsub.s32 0, %v90
    %v92 = vrot.slane %v87, %v91
    %v94 = vmul.f32 %v86, %v92
    %v95 = vld [vmem:[%s2] sm:$0x1]
    %v97 = vlaneseq
    %v98 = vshrl.u32 %v97, 7
    %v99 = vsub.s32 0, %v98
    %v100 = vrot.slane %v95, %v99
    %v102 = vadd.f32 %v94, %v100
    %v103 = vld [vmem:[#allocation5] sm:$0xff]
    %v104 = vld [vmem:[#allocation5 + $0x8] sm:$0xff]
    %v105 = vld [vmem:[%s4] sm:$0x1]
    %v107 = vlaneseq
    %v108 = vshrl.u32 %v107, 7
    %v109 = vsub.s32 0, %v108
    %v110 = vrot.slane %v105, %v109
    %vm112 = vcmask 130048
    %v114 = vsel %vm112, %v102, 0
    %116 = vmatprep.subr.mxu0 0.0
    %117 = vmatpush1.msra.mxu0 %v103
    %118 = vmatprep.subr.mxu0 0.0
    %119 = vmatpush1.msra.mxu0 %v104
    %120 = vmatprep.subr.mxu0 0.0
    %121 = vmatpush1.msra.mxu0 0.0
    %122 = vmatprep.subr.mxu0 0.0
    %123 = vmatpush1.msra.mxu0 0.0
    %124 = vmatprep.subr.mxu0 0.0
    %125 = vmatpush1.msra.mxu0 0.0
    %126 = vmatprep.subr.mxu0 0.0
    %127 = vmatpush1.msra.mxu0 0.0
    %128 = vmatprep.subr.mxu0 0.0
    %129 = vmatpush1.msra.mxu0 0.0
    %130 = vmatprep.subr.mxu0 0.0
    %131 = vmatpush1.msra.mxu0 0.0
    %132 = vmatprep.subr.mxu0 0.0
    %133 = vmatpush1.msra.mxu0 0.0
    %134 = vmatprep.subr.mxu0 0.0
    %135 = vmatpush1.msra.mxu0 0.0
    %136 = vmatprep.subr.mxu0 0.0
    %137 = vmatpush1.msra.mxu0 0.0
    %138 = vmatprep.subr.mxu0 0.0
    %139 = vmatpush1.msra.mxu0 0.0
    %140 = vmatprep.subr.mxu0 0.0
    %141 = vmatpush1.msra.mxu0 0.0
    %142 = vmatprep.subr.mxu0 0.0
    %143 = vmatpush1.msra.mxu0 0.0
    %144 = vmatprep.subr.mxu0 0.0
    %145 = vmatpush1.msra.mxu0 0.0
    %146 = vmatprep.subr.mxu0 0.0
    %147 = vmatpush1.msra.mxu0 0.0
    %148 = vmatprep.subr.mxu0 0.0
    %149 = vmatpush1.msra.mxu0 0.0
    %150 = vmatprep.subr.mxu0 0.0
    %151 = vmatpush1.msra.mxu0 0.0
    %152 = vmatprep.subr.mxu0 0.0
    %153 = vmatpush1.msra.mxu0 0.0
    %154 = vmatprep.subr.mxu0 0.0
    %155 = vmatpush1.msra.mxu0 0.0
    %156 = vmatprep.subr.mxu0 0.0
    %157 = vmatpush1.msra.mxu0 0.0
    %158 = vmatprep.subr.mxu0 0.0
    %159 = vmatpush1.msra.mxu0 0.0
    %160 = vmatprep.subr.mxu0 0.0
    %161 = vmatpush1.msra.mxu0 0.0
    %162 = vmatprep.subr.mxu0 0.0
    %163 = vmatpush1.msra.mxu0 0.0
    %164 = vmatprep.subr.mxu0 0.0
    %165 = vmatpush1.msra.mxu0 0.0
    %166 = vmatprep.subr.mxu0 0.0
    %167 = vmatpush1.msra.mxu0 0.0
    %168 = vmatprep.subr.mxu0 0.0
    %169 = vmatpush1.msra.mxu0 0.0
    %170 = vmatprep.subr.mxu0 0.0
    %171 = vmatpush1.msra.mxu0 0.0
    %172 = vmatprep.subr.mxu0 0.0
    %173 = vmatpush1.msra.mxu0 0.0
    %174 = vmatprep.subr.mxu0 0.0
    %175 = vmatpush1.msra.mxu0 0.0
    %176 = vmatprep.subr.mxu0 0.0
    %177 = vmatpush1.msra.mxu0 0.0
    %178 = vmatprep.subr.mxu0 0.0
    %179 = vmatpush1.msra.mxu0 0.0
    %180 = vmatprep.mubr.f32.mxu0 0.0
    %181 = vmatmul.mubr.f32.gmra.mrb[0].mxu0 %v114
    %v182 = vpop.f32.mrb[0].mxu0
    %v183 = vadd.f32 %v110, %v182
    %v184 = vpop.f32.mrb[0].mxu0
    %185 = vdwg.mxu0
    %v186 = vmax.f32 %v183, 0.0
    %v187 = vld [vmem:[#allocation7] sm:$0xff]
    %v188 = vld [vmem:[#allocation7 + $0x8] sm:$0xff]
    %v189 = vld [vmem:[#allocation7 + $0x10] sm:$0xff]
    %v190 = vld [vmem:[#allocation7 + $0x18] sm:$0xff]
    %v191 = vld [vmem:[#allocation7 + $0x20] sm:$0xff]
    %v192 = vld [vmem:[#allocation7 + $0x28] sm:$0xff]
    %v193 = vld [vmem:[#allocation7 + $0x30] sm:$0xff]
    %v194 = vld [vmem:[#allocation7 + $0x38] sm:$0xff]
    %v195 = vld [vmem:[#allocation7 + $0x40] sm:$0xff]
    %v196 = vld [vmem:[#allocation7 + $0x48] sm:$0xff]
    %v197 = vld [vmem:[#allocation7 + $0x50] sm:$0xff]
    %v198 = vld [vmem:[#allocation7 + $0x58] sm:$0xff]
    %v199 = vld [vmem:[#allocation7 + $0x60] sm:$0xff]
    %v200 = vld [vmem:[#allocation7 + $0x68] sm:$0xff]
    %v201 = vld [vmem:[#allocation7 + $0x70] sm:$0xff]
    %v202 = vld [vmem:[#allocation7 + $0x78] sm:$0xff]
    %v203 = vld [vmem:[%s6] sm:$0x1]
    %v205 = vlaneseq
    %v206 = vshrl.u32 %v205, 7
    %v207 = vsub.s32 0, %v206
    %v208 = vrot.slane %v203, %v207
    %210 = vmatprep.subr.mxu0 0.0
    %211 = vmatpush1.msra.mxu0 %v187
    %212 = vmatprep.subr.mxu0 0.0
    %213 = vmatpush1.msra.mxu0 %v188
    %214 = vmatprep.subr.mxu0 0.0
    %215 = vmatpush1.msra.mxu0 %v189
    %216 = vmatprep.subr.mxu0 0.0
    %217 = vmatpush1.msra.mxu0 %v190
    %218 = vmatprep.subr.mxu0 0.0
    %219 = vmatpush1.msra.mxu0 %v191
    %220 = vmatprep.subr.mxu0 0.0
    %221 = vmatpush1.msra.mxu0 %v192
    %222 = vmatprep.subr.mxu0 0.0
    %223 = vmatpush1.msra.mxu0 %v193
    %224 = vmatprep.subr.mxu0 0.0
    %225 = vmatpush1.msra.mxu0 %v194
    %226 = vmatprep.subr.mxu0 0.0
    %227 = vmatpush1.msra.mxu0 %v195
    %228 = vmatprep.subr.mxu0 0.0
    %229 = vmatpush1.msra.mxu0 %v196
    %230 = vmatprep.subr.mxu0 0.0
    %231 = vmatpush1.msra.mxu0 %v197
    %232 = vmatprep.subr.mxu0 0.0
    %233 = vmatpush1.msra.mxu0 %v198
    %234 = vmatprep.subr.mxu0 0.0
    %235 = vmatpush1.msra.mxu0 %v199
    %236 = vmatprep.subr.mxu0 0.0
    %237 = vmatpush1.msra.mxu0 %v200
    %238 = vmatprep.subr.mxu0 0.0
    %239 = vmatpush1.msra.mxu0 %v201
    %240 = vmatprep.subr.mxu0 0.0
    %241 = vmatpush1.msra.mxu0 %v202
    %242 = vmatprep.subr.mxu0 0.0
    %243 = vmatpush1.msra.mxu0 0.0
    %244 = vmatprep.subr.mxu0 0.0
    %245 = vmatpush1.msra.mxu0 0.0
    %246 = vmatprep.subr.mxu0 0.0
    %247 = vmatpush1.msra.mxu0 0.0
    %248 = vmatprep.subr.mxu0 0.0
    %249 = vmatpush1.msra.mxu0 0.0
    %250 = vmatprep.subr.mxu0 0.0
    %251 = vmatpush1.msra.mxu0 0.0
    %252 = vmatprep.subr.mxu0 0.0
    %253 = vmatpush1.msra.mxu0 0.0
    %254 = vmatprep.subr.mxu0 0.0
    %255 = vmatpush1.msra.mxu0 0.0
    %256 = vmatprep.subr.mxu0 0.0
    %257 = vmatpush1.msra.mxu0 0.0
    %258 = vmatprep.subr.mxu0 0.0
    %259 = vmatpush1.msra.mxu0 0.0
    %260 = vmatprep.subr.mxu0 0.0
    %261 = vmatpush1.msra.mxu0 0.0
    %262 = vmatprep.subr.mxu0 0.0
    %263 = vmatpush1.msra.mxu0 0.0
    %264 = vmatprep.subr.mxu0 0.0
    %265 = vmatpush1.msra.mxu0 0.0
    %266 = vmatprep.subr.mxu0 0.0
    %267 = vmatpush1.msra.mxu0 0.0
    %268 = vmatprep.subr.mxu0 0.0
    %269 = vmatpush1.msra.mxu0 0.0
    %270 = vmatprep.subr.mxu0 0.0
    %271 = vmatpush1.msra.mxu0 0.0
    %272 = vmatprep.subr.mxu0 0.0
    %273 = vmatpush1.msra.mxu0 0.0
    %274 = vmatprep.mubr.f32.mxu0 0.0
    %275 = vmatmul.mubr.f32.gmra.mrb[0].mxu0 %v186
    %v276 = vpop.f32.mrb[0].mxu0
    %v277 = vadd.f32 %v208, %v276
    %v278 = vpop.f32.mrb[0].mxu0
    %279 = vdwg.mxu0
    %v280 = vmax.f32 %v277, 0.0
    %v281 = vld [vmem:[#allocation8] sm:$0xff]
    %v282 = vld [vmem:[#allocation8 + $0x8] sm:$0xff]
    %v283 = vld [vmem:[#allocation8 + $0x10] sm:$0xff]
    %v284 = vld [vmem:[#allocation8 + $0x18] sm:$0xff]
    %v285 = vld [vmem:[#allocation8 + $0x20] sm:$0xff]
    %v286 = vld [vmem:[#allocation8 + $0x28] sm:$0xff]
    %v287 = vld [vmem:[#allocation8 + $0x30] sm:$0xff]
    %v288 = vld [vmem:[#allocation8 + $0x38] sm:$0xff]
    %v289 = vld [vmem:[#allocation8 + $0x40] sm:$0xff]
    %v290 = vld [vmem:[#allocation8 + $0x48] sm:$0xff]
    %v291 = vld [vmem:[#allocation8 + $0x50] sm:$0xff]
    %v292 = vld [vmem:[#allocation8 + $0x58] sm:$0xff]
    %v293 = vld [vmem:[#allocation8 + $0x60] sm:$0xff]
    %v294 = vld [vmem:[#allocation8 + $0x68] sm:$0xff]
    %v295 = vld [vmem:[#allocation8 + $0x70] sm:$0xff]
    %v296 = vld [vmem:[#allocation8 + $0x78] sm:$0xff]
    %v297 = vld [vmem:[%s8] sm:$0x1]
    %v299 = vlaneseq
    %v300 = vshrl.u32 %v299, 7
    %v301 = vsub.s32 0, %v300
    %v302 = vrot.slane %v297, %v301
    %304 = vmatprep.subr.mxu0 0.0
    %305 = vmatpush1.msra.mxu0 %v281
    %306 = vmatprep.subr.mxu0 0.0
    %307 = vmatpush1.msra.mxu0 %v282
    %308 = vmatprep.subr.mxu0 0.0
    %309 = vmatpush1.msra.mxu0 %v283
    %310 = vmatprep.subr.mxu0 0.0
    %311 = vmatpush1.msra.mxu0 %v284
    %312 = vmatprep.subr.mxu0 0.0
    %313 = vmatpush1.msra.mxu0 %v285
    %314 = vmatprep.subr.mxu0 0.0
    %315 = vmatpush1.msra.mxu0 %v286
    %316 = vmatprep.subr.mxu0 0.0
    %317 = vmatpush1.msra.mxu0 %v287
    %318 = vmatprep.subr.mxu0 0.0
    %319 = vmatpush1.msra.mxu0 %v288
    %320 = vmatprep.subr.mxu0 0.0
    %321 = vmatpush1.msra.mxu0 %v289
    %322 = vmatprep.subr.mxu0 0.0
    %323 = vmatpush1.msra.mxu0 %v290
    %324 = vmatprep.subr.mxu0 0.0
    %325 = vmatpush1.msra.mxu0 %v291
    %326 = vmatprep.subr.mxu0 0.0
    %327 = vmatpush1.msra.mxu0 %v292
    %328 = vmatprep.subr.mxu0 0.0
    %329 = vmatpush1.msra.mxu0 %v293
    %330 = vmatprep.subr.mxu0 0.0
    %331 = vmatpush1.msra.mxu0 %v294
    %332 = vmatprep.subr.mxu0 0.0
    %333 = vmatpush1.msra.mxu0 %v295
    %334 = vmatprep.subr.mxu0 0.0
    %335 = vmatpush1.msra.mxu0 %v296
    %336 = vmatprep.subr.mxu0 0.0
    %337 = vmatpush1.msra.mxu0 0.0
    %338 = vmatprep.subr.mxu0 0.0
    %339 = vmatpush1.msra.mxu0 0.0
    %340 = vmatprep.subr.mxu0 0.0
    %341 = vmatpush1.msra.mxu0 0.0
    %342 = vmatprep.subr.mxu0 0.0
    %343 = vmatpush1.msra.mxu0 0.0
    %344 = vmatprep.subr.mxu0 0.0
    %345 = vmatpush1.msra.mxu0 0.0
    %346 = vmatprep.subr.mxu0 0.0
    %347 = vmatpush1.msra.mxu0 0.0
    %348 = vmatprep.subr.mxu0 0.0
    %349 = vmatpush1.msra.mxu0 0.0
    %350 = vmatprep.subr.mxu0 0.0
    %351 = vmatpush1.msra.mxu0 0.0
    %352 = vmatprep.subr.mxu0 0.0
    %353 = vmatpush1.msra.mxu0 0.0
    %354 = vmatprep.subr.mxu0 0.0
    %355 = vmatpush1.msra.mxu0 0.0
    %356 = vmatprep.subr.mxu0 0.0
    %357 = vmatpush1.msra.mxu0 0.0
    %358 = vmatprep.subr.mxu0 0.0
    %359 = vmatpush1.msra.mxu0 0.0
    %360 = vmatprep.subr.mxu0 0.0
    %361 = vmatpush1.msra.mxu0 0.0
    %362 = vmatprep.subr.mxu0 0.0
    %363 = vmatpush1.msra.mxu0 0.0
    %364 = vmatprep.subr.mxu0 0.0
    %365 = vmatpush1.msra.mxu0 0.0
    %366 = vmatprep.subr.mxu0 0.0
    %367 = vmatpush1.msra.mxu0 0.0
    %368 = vmatprep.mubr.f32.mxu0 0.0
    %369 = vmatmul.mubr.f32.gmra.mrb[0].mxu0 %v280
    %v370 = vpop.f32.mrb[0].mxu0
    %v371 = vadd.f32 %v302, %v370
    %v372 = vpop.f32.mrb[0].mxu0
    %373 = vdwg.mxu0
    %v374 = vtanh.pop %v371
    %375 = vst [vmem:[#allocation10] sm:$0xff] %v374
    // Predicated region
    $region54: #{tpu_custom_call.1} parent=1 // pred_check
      _
    $region55: #{tpu_custom_call.1} parent=1 // pred_check_branch
      %377 = sbr.rel (0) target = $region57
    $region56: #{tpu_custom_call.1} parent=1 // pred_region
      %s379 = ssub.s32 128, 128
      %380 = vsyncadd [#allocation4], %s379
      %s382 = sshll.u32 [#allocation10], 4
      %s383 = int_to_ptr.vmem [resolvable:$true] %s382
      %385 = dma.vmem_to_hbm [thread:$0]  %s383, 128, %s9, [#allocation4]
    $region57: #{tpu_custom_call.1} parent=1 // pred_fallthru
      _
    // Predicated region
    $region58: #{tpu_custom_call.1} parent=1 // pred_check
      _
    $region59: #{tpu_custom_call.1} parent=1 // pred_check_branch
      %387 = sbr.rel (0) target = $region61
    $region60: #{tpu_custom_call.1} parent=1 // pred_region
      %388 = dma.done [#allocation4], 128
    $region61: #{tpu_custom_call.1} parent=1 // pred_fallthru
      _
    %389 = vsyncpa [#allocation3], 1
    %390 = vsyncpa [#allocation6], 1
    %391 = vsyncpa [#allocation9], 1
    %392 = vsyncpa [#allocation4], 1

</llo_original>
